<compile_context>
chip_gen: v5e
topology: v5e:2x2
jax: 0.10.0
libtpu: 0.0.40
codegen_flags: <defaults>
</compile_context>

<pallas_src>
import jax
import jax.numpy as jnp
from jax.experimental import pallas as pl
from jax.experimental.pallas import tpu as pltpu

_LEAKY_SLOPE = 0.05  # matches nn.LeakyReLU(0.05) in the original module


def _leaky_relu(x, slope=_LEAKY_SLOPE):
    # max(x, slope*x): 2 VPU ops vs. where's cmp+mul+select.
    return jnp.maximum(x, slope * x)


def _round_up(n, m):
    return ((n + m - 1) // m) * m


def discriminator_kernel(x_ref,
                         w1_ref, b1_ref,
                         w2_ref, b2_ref,
                         w3_ref, b3_ref,
                         w4_ref, b4_ref,
                         out_ref):
    """One batch tile of the fused MLP forward.

    Matmul operands are bf16 (half the weight HBM/VMEM bytes, 2x MXU rate on
    v6e/v7x) with f32 accumulation; all elementwise math (bias, LeakyReLU,
    sigmoid) stays f32 (v5e's VPU/EUP have no bf16 assist).
    """
    # x arrives f32; cast to bf16 on the VPU here (hidden under MXU work)
    # instead of a separate wrapper-side XLA pass that doubles x HBM traffic.
    x = x_ref[...].astype(jnp.bfloat16)                        # (TB, F)

    h1 = jnp.dot(x, w1_ref[...], preferred_element_type=jnp.float32)
    h1 = _leaky_relu(h1 + b1_ref[...])

    h2 = jnp.dot(h1.astype(jnp.bfloat16), w2_ref[...],
                 preferred_element_type=jnp.float32)
    h2 = _leaky_relu(h2 + b2_ref[...])

    h3 = jnp.dot(h2.astype(jnp.bfloat16), w3_ref[...],
                 preferred_element_type=jnp.float32)
    h3 = _leaky_relu(h3 + b3_ref[...])

    # Final 128 -> 1 layer: a one-output-column MXU pass wastes a full matmul
    # issue/drain for 1/128 of the lanes, so do it on the VPU + lane reduce.
    logits = jnp.sum(h3 * w4_ref[...], axis=-1, keepdims=True) + b4_ref[...]

    # Numerically-safe sigmoid: clamp avoids exp overflow, and the approx
    # reciprocal rides the otherwise-idle EUP slot instead of a VPU divide.
    z = jnp.exp(-jnp.clip(logits, -30.0, 30.0))
    out_ref[...] = pl.reciprocal(1.0 + z, approx=True).astype(out_ref.dtype)


def discriminator_forward(x, params, *, block_b=1024):
    """x: (B, in_features) float32.  Returns (B, 1) float32 probabilities."""
    B, F = x.shape
    B8 = _round_up(B, 8)

    # ----- batch-tile selection ------------------------------------------
    # Per-row VMEM cost: f32 x double-buffer + f32 activation temps + bf16
    # activation copies fed to the MXU.  Budget ~20 MiB keeps us well inside
    # v7x's 64 MiB physical / 32 MiB scoped-default VMEM.
    per_row_bytes = 2 * F * 4 + (128 + 512 + 128 + 128) * 4 + (128 + 512) * 2
    tb_cap = max(8, ((20 * 1024 * 1024) // per_row_bytes) // 8 * 8)

    TB = min(block_b, B8, tb_cap)
    # v7x megacore guard: if the whole batch would collapse into a single
    # grid step, split it in two so dimension_semantics=("parallel",) gives
    # both TensorCores a tile (negligible cost on single-core v5e/v6e).
    if B8 >= 16 and B8 <= TB:
        TB = _round_up(pl.cdiv(B8, 2), 8)

    B_pad = _round_up(B, TB)
    grid = (B_pad // TB,)

    # Pad only when needed (stays f32; the bf16 cast happens in-kernel).
    x_in = x if B_pad == B else jnp.pad(x, ((0, B_pad - B), (0, 0)))

    # Weights are tiny and VMEM-resident: cast once here so only bf16 bytes
    # move over HBM / sit in VMEM.  Biases & final row stay f32 (elementwise).
    w1 = params["w1"].astype(jnp.bfloat16)
    w2 = params["w2"].astype(jnp.bfloat16)
    w3 = params["w3"].astype(jnp.bfloat16)
    b1, b2, b3 = params["b1"], params["b2"], params["b3"]
    w4_row = params["w4"].reshape(1, -1)                 # (1, 128) f32
    b4 = params["b4"].reshape(1, 1)                      # (1, 1)   f32

    # Constant index_map -> loaded once, VMEM-resident across all batch tiles.
    resident = lambda a: pl.BlockSpec(a.shape, lambda i: (0,) * a.ndim)

    weight_bytes = ((F * 128 + 128 * 512 + 512 * 128) * 2
                    + (128 + 512 + 128 + 128 + 1) * 4)
    vmem_est = 2 * (2 * TB * F * 4 + 2 * TB * 4) + 2 * weight_bytes \
        + TB * per_row_bytes
    # >=32 MiB helps v5e (16 MiB scoped default); <=48 MiB stays safe on v7x.
    vmem_limit = int(min(max(vmem_est, 32 << 20), 48 << 20))

    out_pad = pl.pallas_call(
        discriminator_kernel,
        out_shape=jax.ShapeDtypeStruct((B_pad, 1), jnp.float32),
        grid=grid,
        in_specs=[pl.BlockSpec((TB, F), lambda i: (i, 0)),
                  resident(w1), resident(b1),
                  resident(w2), resident(b2),
                  resident(w3), resident(b3),
                  resident(w4_row), resident(b4)],
        out_specs=pl.BlockSpec((TB, 1), lambda i: (i, 0)),
        compiler_params=pltpu.CompilerParams(
            dimension_semantics=("parallel",),
            vmem_limit_bytes=vmem_limit),
    )(x_in, w1, b1, w2, b2, w3, b3, w4_row, b4)

    return out_pad[:B] if B_pad != B else out_pad


def init_params(key, in_features):
    """Deterministic init matching the PyTorch module's layer shapes
    (stored as (in, out) instead of PyTorch's (out, in))."""
    dims = [(in_features, 128), (128, 512), (512, 128), (128, 1)]
    params = {}
    keys = jax.random.split(key, len(dims) * 2)
    for i, (din, dout) in enumerate(dims):
        scale = 1.0 / jnp.sqrt(jnp.float32(din))
        params[f"w{i + 1}"] = (jax.random.uniform(
            keys[2 * i], (din, dout), jnp.float32, -1.0, 1.0) * scale)
        params[f"b{i + 1}"] = (jax.random.uniform(
            keys[2 * i + 1], (1, dout), jnp.float32, -1.0, 1.0) * scale)
    return params


def ref_forward(x, p):
    """Pure-JAX f32 reference of the same forward pass."""
    h = x
    for i in range(1, 4):
        h = h @ p[f"w{i}"] + p[f"b{i}"]
        h = jnp.where(h > 0, h, _LEAKY_SLOPE * h)
    h = h @ p["w4"] + p["b4"]
    return jax.nn.sigmoid(h)


if __name__ == "__main__":
    in_features = 64

    key = jax.random.PRNGKey(0)
    k_params, k_x1, k_x2 = jax.random.split(key, 3)
    params = init_params(k_params, in_features)

    # Small batch (single tile, no padding) and a larger one that exercises
    # batch padding plus the >=2-step "parallel" batch grid.
    for k_x, batch in ((k_x1, 8), (k_x2, 300)):
        x = jax.random.normal(k_x, (batch, in_features), dtype=jnp.float32)
        out = jax.block_until_ready(discriminator_forward(x, params))
        expected = ref_forward(x, params)
        assert out.shape == (batch, 1), out.shape
        # bf16 matmul operands vs. f32 reference -> loose tolerance.
        err = float(jnp.max(jnp.abs(out - expected)))
        assert jnp.allclose(out, expected, atol=2e-2, rtol=2e-2), err

    print("KERNEL_OK")
</pallas_src>

<mosaic_0001>
module attributes {stable_mosaic.version = 11 : i64} {
  func.func @discriminator_kernel(%arg0: i32, %arg1: memref<8x64xf32, #tpu.memory_space<vmem>>, %arg2: memref<64x128xbf16, #tpu.memory_space<vmem>>, %arg3: memref<1x128xf32, #tpu.memory_space<vmem>>, %arg4: memref<128x512xbf16, #tpu.memory_space<vmem>>, %arg5: memref<1x512xf32, #tpu.memory_space<vmem>>, %arg6: memref<512x128xbf16, #tpu.memory_space<vmem>>, %arg7: memref<1x128xf32, #tpu.memory_space<vmem>>, %arg8: memref<1x128xf32, #tpu.memory_space<vmem>>, %arg9: memref<1x1xf32, #tpu.memory_space<vmem>>, %arg10: memref<8x1xf32, #tpu.memory_space<vmem>>) attributes {dimension_semantics = [#tpu.dimension_semantics<parallel>], iteration_bounds = array<i64: 1>, scalar_prefetch = 0 : i64, scratch_operands = 0 : i64, tpu.core_type = #tpu.core_type<tc>, window_params = [{transform_indices = @transform_0, window_bounds = array<i64: 8, 64>}, {pipeline_mode = #tpu.pipeline_mode<synchronous>, transform_indices = @transform_1, window_bounds = array<i64: 64, 128>}, {pipeline_mode = #tpu.pipeline_mode<synchronous>, transform_indices = @transform_2, window_bounds = array<i64: 1, 128>}, {pipeline_mode = #tpu.pipeline_mode<synchronous>, transform_indices = @transform_3, window_bounds = array<i64: 128, 512>}, {pipeline_mode = #tpu.pipeline_mode<synchronous>, transform_indices = @transform_4, window_bounds = array<i64: 1, 512>}, {pipeline_mode = #tpu.pipeline_mode<synchronous>, transform_indices = @transform_5, window_bounds = array<i64: 512, 128>}, {pipeline_mode = #tpu.pipeline_mode<synchronous>, transform_indices = @transform_6, window_bounds = array<i64: 1, 128>}, {pipeline_mode = #tpu.pipeline_mode<synchronous>, transform_indices = @transform_7, window_bounds = array<i64: 1, 128>}, {pipeline_mode = #tpu.pipeline_mode<synchronous>, transform_indices = @transform_8, window_bounds = array<i64: 1, 1>}, {transform_indices = @transform_9, window_bounds = array<i64: 8, 1>}]} {
    %c0 = arith.constant 0 : index
    %c0_0 = arith.constant 0 : index
    %0 = vector.load %arg1[%c0, %c0_0] : memref<8x64xf32, #tpu.memory_space<vmem>>, vector<8x64xf32>
    %1 = arith.truncf %0 : vector<8x64xf32> to vector<8x64xbf16>
    %c0_1 = arith.constant 0 : index
    %c0_2 = arith.constant 0 : index
    %2 = vector.load %arg2[%c0_1, %c0_2] : memref<64x128xbf16, #tpu.memory_space<vmem>>, vector<64x128xbf16>
    %cst = arith.constant dense<0.000000e+00> : vector<8x128xf32>
    %3 = tpu.matmul %1, %2, %cst {dimension_numbers = #tpu.dot_dimension_numbers<[1], [0], [0], [1], [0, 0, 1, 1], [], []>} : vector<8x64xbf16>, vector<64x128xbf16>, vector<8x128xf32> -> vector<8x128xf32>
    %c0_3 = arith.constant 0 : index
    %c0_4 = arith.constant 0 : index
    %4 = vector.load %arg3[%c0_3, %c0_4] : memref<1x128xf32, #tpu.memory_space<vmem>>, vector<1x128xf32>
    %5 = vector.broadcast %4 : vector<1x128xf32> to vector<8x128xf32>
    %6 = arith.addf %3, %5 : vector<8x128xf32>
    %cst_5 = arith.constant 5.000000e-02 : f32
    %7 = vector.broadcast %cst_5 : f32 to vector<8x128xf32>
    %8 = arith.mulf %7, %6 : vector<8x128xf32>
    %9 = arith.maximumf %6, %8 : vector<8x128xf32>
    %10 = arith.truncf %9 : vector<8x128xf32> to vector<8x128xbf16>
    %c0_6 = arith.constant 0 : index
    %c0_7 = arith.constant 0 : index
    %11 = vector.load %arg4[%c0_6, %c0_7] : memref<128x512xbf16, #tpu.memory_space<vmem>>, vector<128x512xbf16>
    %cst_8 = arith.constant dense<0.000000e+00> : vector<8x512xf32>
    %12 = tpu.matmul %10, %11, %cst_8 {dimension_numbers = #tpu.dot_dimension_numbers<[1], [0], [0], [1], [0, 0, 1, 1], [], []>} : vector<8x128xbf16>, vector<128x512xbf16>, vector<8x512xf32> -> vector<8x512xf32>
    %c0_9 = arith.constant 0 : index
    %c0_10 = arith.constant 0 : index
    %13 = vector.load %arg5[%c0_9, %c0_10] : memref<1x512xf32, #tpu.memory_space<vmem>>, vector<1x512xf32>
    %14 = vector.broadcast %13 : vector<1x512xf32> to vector<8x512xf32>
    %15 = arith.addf %12, %14 : vector<8x512xf32>
    %cst_11 = arith.constant 5.000000e-02 : f32
    %16 = vector.broadcast %cst_11 : f32 to vector<8x512xf32>
    %17 = arith.mulf %16, %15 : vector<8x512xf32>
    %18 = arith.maximumf %15, %17 : vector<8x512xf32>
    %19 = arith.truncf %18 : vector<8x512xf32> to vector<8x512xbf16>
    %c0_12 = arith.constant 0 : index
    %c0_13 = arith.constant 0 : index
    %20 = vector.load %arg6[%c0_12, %c0_13] : memref<512x128xbf16, #tpu.memory_space<vmem>>, vector<512x128xbf16>
    %cst_14 = arith.constant dense<0.000000e+00> : vector<8x128xf32>
    %21 = tpu.matmul %19, %20, %cst_14 {dimension_numbers = #tpu.dot_dimension_numbers<[1], [0], [0], [1], [0, 0, 1, 1], [], []>} : vector<8x512xbf16>, vector<512x128xbf16>, vector<8x128xf32> -> vector<8x128xf32>
    %c0_15 = arith.constant 0 : index
    %c0_16 = arith.constant 0 : index
    %22 = vector.load %arg7[%c0_15, %c0_16] : memref<1x128xf32, #tpu.memory_space<vmem>>, vector<1x128xf32>
    %23 = vector.broadcast %22 : vector<1x128xf32> to vector<8x128xf32>
    %24 = arith.addf %21, %23 : vector<8x128xf32>
    %cst_17 = arith.constant 5.000000e-02 : f32
    %25 = vector.broadcast %cst_17 : f32 to vector<8x128xf32>
    %26 = arith.mulf %25, %24 : vector<8x128xf32>
    %27 = arith.maximumf %24, %26 : vector<8x128xf32>
    %c0_18 = arith.constant 0 : index
    %c0_19 = arith.constant 0 : index
    %28 = vector.load %arg8[%c0_18, %c0_19] : memref<1x128xf32, #tpu.memory_space<vmem>>, vector<1x128xf32>
    %29 = vector.broadcast %28 : vector<1x128xf32> to vector<8x128xf32>
    %30 = arith.mulf %27, %29 : vector<8x128xf32>
    %cst_20 = arith.constant dense<0.000000e+00> : vector<8xf32>
    %31 = vector.multi_reduction <add>, %30, %cst_20 [1] : vector<8x128xf32> to vector<8xf32>
    %32 = vector.shape_cast %31 : vector<8xf32> to vector<8x1xf32>
    %c0_21 = arith.constant 0 : index
    %c0_22 = arith.constant 0 : index
    %33 = vector.load %arg9[%c0_21, %c0_22] : memref<1x1xf32, #tpu.memory_space<vmem>>, vector<1x1xf32>
    %34 = vector.broadcast %33 : vector<1x1xf32> to vector<8x1xf32>
    %35 = arith.addf %32, %34 : vector<8x1xf32>
    %cst_23 = arith.constant -3.000000e+01 : f32
    %cst_24 = arith.constant 3.000000e+01 : f32
    %36 = vector.broadcast %cst_23 : f32 to vector<8x1xf32>
    %37 = arith.maximumf %36, %35 : vector<8x1xf32>
    %38 = vector.broadcast %cst_24 : f32 to vector<8x1xf32>
    %39 = arith.minimumf %38, %37 : vector<8x1xf32>
    %cst_25 = arith.constant 0.000000e+00 : f32
    %40 = vector.broadcast %cst_25 : f32 to vector<8x1xf32>
    %41 = arith.subf %40, %39 : vector<8x1xf32>
    %42 = math.exp %41 : vector<8x1xf32>
    %cst_26 = arith.constant 1.000000e+00 : f32
    %43 = vector.broadcast %cst_26 : f32 to vector<8x1xf32>
    %44 = arith.addf %43, %42 : vector<8x1xf32>
    %45 = tpu.reciprocal %44 {approx = true} : vector<8x1xf32> -> vector<8x1xf32>
    %c0_27 = arith.constant 0 : index
    %c0_28 = arith.constant 0 : index
    %46 = vector.load %arg10[%c0_27, %c0_28] : memref<8x1xf32, #tpu.memory_space<vmem>>, vector<8x1xf32>
    tpu.vector_store %arg10[%c0_27, %c0_28], %45 {strides = array<i32>} : memref<8x1xf32, #tpu.memory_space<vmem>>, vector<8x1xf32>,
    return
  }
  func.func @transform_0(%arg0: i32) -> (i32, i32) {
    %c0_i32 = arith.constant 0 : i32
    %c0_i32_0 = arith.constant 0 : i32
    return %arg0, %c0_i32 : i32, i32
  }
  func.func @transform_1(%arg0: i32) -> (i32, i32) {
    %c0_i32 = arith.constant 0 : i32
    %c0_i32_0 = arith.constant 0 : i32
    %c0_i32_1 = arith.constant 0 : i32
    return %c0_i32, %c0_i32_0 : i32, i32
  }
  func.func @transform_2(%arg0: i32) -> (i32, i32) {
    %c0_i32 = arith.constant 0 : i32
    %c0_i32_0 = arith.constant 0 : i32
    %c0_i32_1 = arith.constant 0 : i32
    return %c0_i32, %c0_i32_0 : i32, i32
  }
  func.func @transform_3(%arg0: i32) -> (i32, i32) {
    %c0_i32 = arith.constant 0 : i32
    %c0_i32_0 = arith.constant 0 : i32
    %c0_i32_1 = arith.constant 0 : i32
    return %c0_i32, %c0_i32_0 : i32, i32
  }
  func.func @transform_4(%arg0: i32) -> (i32, i32) {
    %c0_i32 = arith.constant 0 : i32
    %c0_i32_0 = arith.constant 0 : i32
    %c0_i32_1 = arith.constant 0 : i32
    return %c0_i32, %c0_i32_0 : i32, i32
  }
  func.func @transform_5(%arg0: i32) -> (i32, i32) {
    %c0_i32 = arith.constant 0 : i32
    %c0_i32_0 = arith.constant 0 : i32
    %c0_i32_1 = arith.constant 0 : i32
    return %c0_i32, %c0_i32_0 : i32, i32
  }
  func.func @transform_6(%arg0: i32) -> (i32, i32) {
    %c0_i32 = arith.constant 0 : i32
    %c0_i32_0 = arith.constant 0 : i32
    %c0_i32_1 = arith.constant 0 : i32
    return %c0_i32, %c0_i32_0 : i32, i32
  }
  func.func @transform_7(%arg0: i32) -> (i32, i32) {
    %c0_i32 = arith.constant 0 : i32
    %c0_i32_0 = arith.constant 0 : i32
    %c0_i32_1 = arith.constant 0 : i32
    return %c0_i32, %c0_i32_0 : i32, i32
  }
  func.func @transform_8(%arg0: i32) -> (i32, i32) {
    %c0_i32 = arith.constant 0 : i32
    %c0_i32_0 = arith.constant 0 : i32
    %c0_i32_1 = arith.constant 0 : i32
    return %c0_i32, %c0_i32_0 : i32, i32
  }
  func.func @transform_9(%arg0: i32) -> (i32, i32) {
    %c0_i32 = arith.constant 0 : i32
    %c0_i32_0 = arith.constant 0 : i32
    return %arg0, %c0_i32 : i32, i32
  }
}

</mosaic_0001>

<llo_original>
// kernel: tpu_custom_call.1
$region0: #{tpu_custom_call.1}
  #allocation0 [shape = 'u32[]', space=smem, size = 0x4, offset = 0x4, fixed_abs, tag = 'smem constant byte address 0x4 - core index']
  #allocation1 [shape = 'u32[72,128]{1,0:T(1,128)}', space=vmem, size = 0x9000, scoped, tag = 'internal scratch']
  #allocation2 [shape = 'f32[1,1]{1,0:T(1,128)S(1)}', space=vmem, size = 0x200, scoped, tag = 'scoped memory for tpu_custom_call.1']
  %s0 = inlined_call_operand.hbm [shape: f32[8,64], index: 0, kind: input, shape index: {}]
  %s1 = inlined_call_operand.hbm [shape: bf16[64,128], index: 1, kind: input, shape index: {}]
  %s2 = inlined_call_operand.vmem [shape: f32[1,128], index: 2, kind: input, shape index: {}]
  %s3 = inlined_call_operand.hbm [shape: bf16[128,512], index: 3, kind: input, shape index: {}]
  %s4 = inlined_call_operand.vmem [shape: f32[1,512], index: 4, kind: input, shape index: {}]
  %s5 = inlined_call_operand.hbm [shape: bf16[512,128], index: 5, kind: input, shape index: {}]
  %s6 = inlined_call_operand.vmem [shape: f32[1,128], index: 6, kind: input, shape index: {}]
  %s7 = inlined_call_operand.vmem [shape: f32[1,128], index: 7, kind: input, shape index: {}]
  %s8 = inlined_call_operand.<no memory space> [shape: f32[1,1], index: 8, kind: input, shape index: {}]
  %s9 = inlined_call_operand.vmem [shape: f32[8,1], index: 9, kind: output, shape index: {}]
  %s10 = sld [smem:[#allocation0]]
  $region62: #{tpu_custom_call.1} parent=0
    _
  %s12 = ssub.s32 1, %s10
  %s13 = scalar_select 0, %s12, %s10
  %v14 = vstv %s8
  %15 = vst [vmem:[#allocation2] sm:$0x1] %v14
  $region1: #{tpu_custom_call.1} parent=0
    #allocation3 [shape = 'u8[4096]{0}', space=vmem, size = 0x1000, scoped, tag = 'input window, operand 0, single buffered']
    #allocation4 [shape = 's32[1]{0}', space=sflag, size = 0x4, scoped, tag = 'scoped memory for tpu_custom_call.1']
    #allocation5 [shape = 'u8[16384]{0}', space=vmem, size = 0x4000, scoped, tag = 'input window, operand 1, single buffered']
    #allocation6 [shape = 's32[1]{0}', space=sflag, size = 0x4, scoped, tag = 'scoped memory for tpu_custom_call.1']
    #allocation7 [shape = 'u8[131072]{0}', space=vmem, size = 0x20000, scoped, tag = 'input window, operand 3, single buffered']
    #allocation8 [shape = 'u8[131072]{0}', space=vmem, size = 0x20000, scoped, tag = 'input window, operand 5, single buffered']
    #allocation9 [shape = 's32[1]{0}', space=sflag, size = 0x4, scoped, tag = 'scoped memory for tpu_custom_call.1']
    %16 = vsyncpa [#allocation4], 0
    %17 = vsyncpa [#allocation6], 0
    %18 = vsyncpa [#allocation9], 0
    // Predicated region
    $region2: #{tpu_custom_call.1} parent=1 // pred_check
      _
    $region3: #{tpu_custom_call.1} parent=1 // pred_check_branch
      %20 = sbr.rel (0) target = $region5
    $region4: #{tpu_custom_call.1} parent=1 // pred_region
      %22 = vsyncadd [#allocation4], 0
      %s24 = sshll.u32 %s0, 4
      %s25 = int_to_ptr.hbm [resolvable:$true] %s24
      %s26 = sshll.u32 [#allocation3], 4
      %s27 = int_to_ptr.vmem [resolvable:$true] %s26
      %29 = dma.hbm_to_vmem [thread:$0]  %s25, 128, %s27, [#allocation4]
    $region5: #{tpu_custom_call.1} parent=1 // pred_fallthru
      _
    // Predicated region
    $region6: #{tpu_custom_call.1} parent=1 // pred_check
      _
    $region7: #{tpu_custom_call.1} parent=1 // pred_check_branch
      %31 = sbr.rel (0) target = $region9
    $region8: #{tpu_custom_call.1} parent=1 // pred_region
      %33 = vsyncadd [#allocation6], 0
      %s34 = sshll.u32 %s1, 4
      %s35 = int_to_ptr.hbm [resolvable:$true] %s34
      %s36 = sshll.u32 [#allocation5], 4
      %s37 = int_to_ptr.vmem [resolvable:$true] %s36
      %42 = dma.hbm_to_vmem [thread:$0]  %s35, 512, %s37, [#allocation6], 64, 64, 4
    $region9: #{tpu_custom_call.1} parent=1 // pred_fallthru
      _
    // Predicated region
    $region10: #{tpu_custom_call.1} parent=1 // pred_check
      _
    $region11: #{tpu_custom_call.1} parent=1 // pred_check_branch
      %44 = sbr.rel (0) target = $region13
    $region12: #{tpu_custom_call.1} parent=1 // pred_region
      _
    $region13: #{tpu_custom_call.1} parent=1 // pred_fallthru
      _
    // Predicated region
    $region14: #{tpu_custom_call.1} parent=1 // pred_check
      _
    $region15: #{tpu_custom_call.1} parent=1 // pred_check_branch
      %46 = sbr.rel (0) target = $region17
    $region16: #{tpu_custom_call.1} parent=1 // pred_region
      %48 = vsyncadd [#allocation6], 0
      %s49 = sshll.u32 %s3, 4
      %s50 = int_to_ptr.hbm [resolvable:$true] %s49
      %s51 = sshll.u32 [#allocation7], 4
      %s52 = int_to_ptr.vmem [resolvable:$true] %s51
      %57 = dma.hbm_to_vmem [thread:$0]  %s50, 4096, %s52, [#allocation6], 256, 256, 16
    $region17: #{tpu_custom_call.1} parent=1 // pred_fallthru
      _
    // Predicated region
    $region18: #{tpu_custom_call.1} parent=1 // pred_check
      _
    $region19: #{tpu_custom_call.1} parent=1 // pred_check_branch
      %59 = sbr.rel (0) target = $region21
    $region20: #{tpu_custom_call.1} parent=1 // pred_region
      _
    $region21: #{tpu_custom_call.1} parent=1 // pred_fallthru
      _
    // Predicated region
    $region22: #{tpu_custom_call.1} parent=1 // pred_check
      _
    $region23: #{tpu_custom_call.1} parent=1 // pred_check_branch
      %61 = sbr.rel (0) target = $region25
    $region24: #{tpu_custom_call.1} parent=1 // pred_region
      %63 = vsyncadd [#allocation9], 0
      %s64 = sshll.u32 %s5, 4
      %s65 = int_to_ptr.hbm [resolvable:$true] %s64
      %s66 = sshll.u32 [#allocation8], 4
      %s67 = int_to_ptr.vmem [resolvable:$true] %s66
      %72 = dma.hbm_to_vmem [thread:$0]  %s65, 4096, %s67, [#allocation9], 64, 64, 4
    $region25: #{tpu_custom_call.1} parent=1 // pred_fallthru
      _
    // Predicated region
    $region26: #{tpu_custom_call.1} parent=1 // pred_check
      _
    $region27: #{tpu_custom_call.1} parent=1 // pred_check_branch
      %74 = sbr.rel (0) target = $region29
    $region28: #{tpu_custom_call.1} parent=1 // pred_region
      _
    $region29: #{tpu_custom_call.1} parent=1 // pred_fallthru
      _
    // Predicated region
    $region30: #{tpu_custom_call.1} parent=1 // pred_check
      _
    $region31: #{tpu_custom_call.1} parent=1 // pred_check_branch
      %76 = sbr.rel (0) target = $region33
    $region32: #{tpu_custom_call.1} parent=1 // pred_region
      _
    $region33: #{tpu_custom_call.1} parent=1 // pred_fallthru
      _
    // Predicated region
    $region34: #{tpu_custom_call.1} parent=1 // pred_check
      _
    $region35: #{tpu_custom_call.1} parent=1 // pred_check_branch
      %78 = sbr.rel (0) target = $region37
    $region36: #{tpu_custom_call.1} parent=1 // pred_region
      _
    $region37: #{tpu_custom_call.1} parent=1 // pred_fallthru
      _
    // Predicated region
    $region38: #{tpu_custom_call.1} parent=1 // pred_check
      _
    $region39: #{tpu_custom_call.1} parent=1 // pred_check_branch
      %80 = sbr.rel (0) target = $region41
    $region40: #{tpu_custom_call.1} parent=1 // pred_region
      %82 = dma.done [#allocation4], 128
    $region41: #{tpu_custom_call.1} parent=1 // pred_fallthru
      _
    // Predicated region
    $region42: #{tpu_custom_call.1} parent=1 // pred_check
      _
    $region43: #{tpu_custom_call.1} parent=1 // pred_check_branch
      %84 = sbr.rel (0) target = $region45
    $region44: #{tpu_custom_call.1} parent=1 // pred_region
      %86 = dma.done [#allocation6], 512
    $region45: #{tpu_custom_call.1} parent=1 // pred_fallthru
      _
    // Predicated region
    $region46: #{tpu_custom_call.1} parent=1 // pred_check
      _
    $region47: #{tpu_custom_call.1} parent=1 // pred_check_branch
      %88 = sbr.rel (0) target = $region49
    $region48: #{tpu_custom_call.1} parent=1 // pred_region
      %90 = dma.done [#allocation6], 4096
    $region49: #{tpu_custom_call.1} parent=1 // pred_fallthru
      _
    // Predicated region
    $region50: #{tpu_custom_call.1} parent=1 // pred_check
      _
    $region51: #{tpu_custom_call.1} parent=1 // pred_check_branch
      %92 = sbr.rel (0) target = $region53
    $region52: #{tpu_custom_call.1} parent=1 // pred_region
      %94 = dma.done [#allocation9], 4096
    $region53: #{tpu_custom_call.1} parent=1 // pred_fallthru
      _
    %v96 = vld [vmem:[#allocation3] sm:$0xff]
    %v97 = vpack.c.bf16 %v96, %v96
    %v98 = vld [vmem:[#allocation5] sm:$0xf]
    %v99 = vld [vmem:[#allocation5 + $0x4] sm:$0xf]
    %v100 = vld [vmem:[#allocation5 + $0x8] sm:$0xf]
    %v101 = vld [vmem:[#allocation5 + $0xc] sm:$0xf]
    %v102 = vld [vmem:[#allocation5 + $0x10] sm:$0xf]
    %v103 = vld [vmem:[#allocation5 + $0x14] sm:$0xf]
    %v104 = vld [vmem:[#allocation5 + $0x18] sm:$0xf]
    %v105 = vld [vmem:[#allocation5 + $0x1c] sm:$0xf]
    %v106 = vld [vmem:[%s2] sm:$0x1]
    %v108 = vperm.slane %v106, 0
    %v118 = vunpack.c.l.b16 %v98
    %v119 = vunpack.c.l.b16 %v99
    %v120 = vunpack.c.l.b16 %v100
    %v121 = vunpack.c.l.b16 %v101
    %v122 = vunpack.c.l.b16 %v102
    %v123 = vunpack.c.l.b16 %v103
    %v124 = vunpack.c.l.b16 %v104
    %v125 = vunpack.c.l.b16 %v105
    %v126 = vpack.c.b16 %v119, %v118
    %v127 = vpack.c.b16 %v121, %v120
    %v128 = vpack.c.b16 %v123, %v122
    %v129 = vpack.c.b16 %v125, %v124
    %vm134 = vcmask 523264
    %v136 = vsel %vm134, %v97, 0
    %138 = vmatpush.bf16.msra.mxu0 0
    %139 = vmatpush.bf16.msra.mxu0 0
    %140 = vmatpush.bf16.msra.mxu0 0
    %141 = vmatpush.bf16.msra.mxu0 0
    %142 = vmatpush.bf16.msra.mxu0 %v129
    %143 = vmatpush.bf16.msra.mxu0 %v128
    %144 = vmatpush.bf16.msra.mxu0 %v127
    %145 = vmatpush.bf16.msra.mxu0 %v126
    %146 = vmatmul.bf16.gmra.mxu0 %v136
    %v147 = vpop.f32.mrf.mxu0
    %v148 = vadd.f32 %v108, %v147
    %v149 = vpop.f32.mrf.mxu0
    %150 = vdwg.mxu0
    %v151 = vmul.f32 %v148, 0.05
    %v152 = vmax.f32 %v148, %v151
    %v153 = vpack.c.bf16 %v152, %v152
    %v154 = vld [vmem:[#allocation7] sm:$0xff]
    %v155 = vld [vmem:[#allocation7 + $0x8] sm:$0xff]
    %v156 = vld [vmem:[#allocation7 + $0x10] sm:$0xff]
    %v157 = vld [vmem:[#allocation7 + $0x18] sm:$0xff]
    %v158 = vld [vmem:[#allocation7 + $0x20] sm:$0xff]
    %v159 = vld [vmem:[#allocation7 + $0x28] sm:$0xff]
    %v160 = vld [vmem:[#allocation7 + $0x30] sm:$0xff]
    %v161 = vld [vmem:[#allocation7 + $0x38] sm:$0xff]
    %v162 = vld [vmem:[#allocation7 + $0x40] sm:$0xff]
    %v163 = vld [vmem:[#allocation7 + $0x48] sm:$0xff]
    %v164 = vld [vmem:[#allocation7 + $0x50] sm:$0xff]
    %v165 = vld [vmem:[#allocation7 + $0x58] sm:$0xff]
    %v166 = vld [vmem:[#allocation7 + $0x60] sm:$0xff]
    %v167 = vld [vmem:[#allocation7 + $0x68] sm:$0xff]
    %v168 = vld [vmem:[#allocation7 + $0x70] sm:$0xff]
    %v169 = vld [vmem:[#allocation7 + $0x78] sm:$0xff]
    %v170 = vld [vmem:[#allocation7 + $0x80] sm:$0xff]
    %v171 = vld [vmem:[#allocation7 + $0x88] sm:$0xff]
    %v172 = vld [vmem:[#allocation7 + $0x90] sm:$0xff]
    %v173 = vld [vmem:[#allocation7 + $0x98] sm:$0xff]
    %v174 = vld [vmem:[#allocation7 + $0xa0] sm:$0xff]
    %v175 = vld [vmem:[#allocation7 + $0xa8] sm:$0xff]
    %v176 = vld [vmem:[#allocation7 + $0xb0] sm:$0xff]
    %v177 = vld [vmem:[#allocation7 + $0xb8] sm:$0xff]
    %v178 = vld [vmem:[#allocation7 + $0xc0] sm:$0xff]
    %v179 = vld [vmem:[#allocation7 + $0xc8] sm:$0xff]
    %v180 = vld [vmem:[#allocation7 + $0xd0] sm:$0xff]
    %v181 = vld [vmem:[#allocation7 + $0xd8] sm:$0xff]
    %v182 = vld [vmem:[#allocation7 + $0xe0] sm:$0xff]
    %v183 = vld [vmem:[#allocation7 + $0xe8] sm:$0xff]
    %v184 = vld [vmem:[#allocation7 + $0xf0] sm:$0xff]
    %v185 = vld [vmem:[#allocation7 + $0xf8] sm:$0xff]
    %v186 = vld [vmem:[%s4] sm:$0xf]
    %v188 = vperm.slane %v186, 0
    %v189 = vperm.slane %v186, 1
    %v190 = vperm.slane %v186, 2
    %v191 = vperm.slane %v186, 3
    %v228 = vunpack.c.l.b16 %v154
    %v229 = vunpack.c.h.b16 %v154
    %v230 = vunpack.c.l.b16 %v155
    %v231 = vunpack.c.h.b16 %v155
    %v232 = vunpack.c.l.b16 %v156
    %v233 = vunpack.c.h.b16 %v156
    %v234 = vunpack.c.l.b16 %v157
    %v235 = vunpack.c.h.b16 %v157
    %v236 = vunpack.c.l.b16 %v158
    %v237 = vunpack.c.h.b16 %v158
    %v238 = vunpack.c.l.b16 %v159
    %v239 = vunpack.c.h.b16 %v159
    %v240 = vunpack.c.l.b16 %v160
    %v241 = vunpack.c.h.b16 %v160
    %v242 = vunpack.c.l.b16 %v161
    %v243 = vunpack.c.h.b16 %v161
    %v244 = vunpack.c.l.b16 %v162
    %v245 = vunpack.c.h.b16 %v162
    %v246 = vunpack.c.l.b16 %v163
    %v247 = vunpack.c.h.b16 %v163
    %v248 = vunpack.c.l.b16 %v164
    %v249 = vunpack.c.h.b16 %v164
    %v250 = vunpack.c.l.b16 %v165
    %v251 = vunpack.c.h.b16 %v165
    %v252 = vunpack.c.l.b16 %v166
    %v253 = vunpack.c.h.b16 %v166
    %v254 = vunpack.c.l.b16 %v167
    %v255 = vunpack.c.h.b16 %v167
    %v256 = vunpack.c.l.b16 %v168
    %v257 = vunpack.c.h.b16 %v168
    %v258 = vunpack.c.l.b16 %v169
    %v259 = vunpack.c.h.b16 %v169
    %v260 = vunpack.c.l.b16 %v170
    %v261 = vunpack.c.h.b16 %v170
    %v262 = vunpack.c.l.b16 %v171
    %v263 = vunpack.c.h.b16 %v171
    %v264 = vunpack.c.l.b16 %v172
    %v265 = vunpack.c.h.b16 %v172
    %v266 = vunpack.c.l.b16 %v173
    %v267 = vunpack.c.h.b16 %v173
    %v268 = vunpack.c.l.b16 %v174
    %v269 = vunpack.c.h.b16 %v174
    %v270 = vunpack.c.l.b16 %v175
    %v271 = vunpack.c.h.b16 %v175
    %v272 = vunpack.c.l.b16 %v176
    %v273 = vunpack.c.h.b16 %v176
    %v274 = vunpack.c.l.b16 %v177
    %v275 = vunpack.c.h.b16 %v177
    %v276 = vunpack.c.l.b16 %v178
    %v277 = vunpack.c.h.b16 %v178
    %v278 = vunpack.c.l.b16 %v179
    %v279 = vunpack.c.h.b16 %v179
    %v280 = vunpack.c.l.b16 %v180
    %v281 = vunpack.c.h.b16 %v180
    %v282 = vunpack.c.l.b16 %v181
    %v283 = vunpack.c.h.b16 %v181
    %v284 = vunpack.c.l.b16 %v182
    %v285 = vunpack.c.h.b16 %v182
    %v286 = vunpack.c.l.b16 %v183
    %v287 = vunpack.c.h.b16 %v183
    %v288 = vunpack.c.l.b16 %v184
    %v289 = vunpack.c.h.b16 %v184
    %v290 = vunpack.c.l.b16 %v185
    %v291 = vunpack.c.h.b16 %v185
    %v292 = vpack.c.b16 %v232, %v228
    %v293 = vpack.c.b16 %v233, %v229
    %v294 = vpack.c.b16 %v234, %v230
    %v295 = vpack.c.b16 %v235, %v231
    %v296 = vpack.c.b16 %v240, %v236
    %v297 = vpack.c.b16 %v241, %v237
    %v298 = vpack.c.b16 %v242, %v238
    %v299 = vpack.c.b16 %v243, %v239
    %v300 = vpack.c.b16 %v248, %v244
    %v301 = vpack.c.b16 %v249, %v245
    %v302 = vpack.c.b16 %v250, %v246
    %v303 = vpack.c.b16 %v251, %v247
    %v304 = vpack.c.b16 %v256, %v252
    %v305 = vpack.c.b16 %v257, %v253
    %v306 = vpack.c.b16 %v258, %v254
    %v307 = vpack.c.b16 %v259, %v255
    %v308 = vpack.c.b16 %v264, %v260
    %v309 = vpack.c.b16 %v265, %v261
    %v310 = vpack.c.b16 %v266, %v262
    %v311 = vpack.c.b16 %v267, %v263
    %v312 = vpack.c.b16 %v272, %v268
    %v313 = vpack.c.b16 %v273, %v269
    %v314 = vpack.c.b16 %v274, %v270
    %v315 = vpack.c.b16 %v275, %v271
    %v316 = vpack.c.b16 %v280, %v276
    %v317 = vpack.c.b16 %v281, %v277
    %v318 = vpack.c.b16 %v282, %v278
    %v319 = vpack.c.b16 %v283, %v279
    %v320 = vpack.c.b16 %v288, %v284
    %v321 = vpack.c.b16 %v289, %v285
    %v322 = vpack.c.b16 %v290, %v286
    %v323 = vpack.c.b16 %v291, %v287
    %356 = vmatpush.bf16.msra.mxu0 %v320
    %357 = vmatpush.bf16.msra.mxu0 %v316
    %358 = vmatpush.bf16.msra.mxu0 %v312
    %359 = vmatpush.bf16.msra.mxu0 %v308
    %360 = vmatpush.bf16.msra.mxu0 %v304
    %361 = vmatpush.bf16.msra.mxu0 %v300
    %362 = vmatpush.bf16.msra.mxu0 %v296
    %363 = vmatpush.bf16.msra.mxu0 %v292
    %364 = vmatmul.bf16.gmra.mxu0 %v153
    %v365 = vpop.f32.mrf.mxu0
    %v366 = vadd.f32 %v188, %v365
    %v367 = vpop.f32.mrf.mxu0
    %368 = vdwg.mxu0
    %369 = vmatpush.bf16.msra.mxu0 %v321
    %370 = vmatpush.bf16.msra.mxu0 %v317
    %371 = vmatpush.bf16.msra.mxu0 %v313
    %372 = vmatpush.bf16.msra.mxu0 %v309
    %373 = vmatpush.bf16.msra.mxu0 %v305
    %374 = vmatpush.bf16.msra.mxu0 %v301
    %375 = vmatpush.bf16.msra.mxu0 %v297
    %376 = vmatpush.bf16.msra.mxu0 %v293
    %377 = vmatmul.bf16.gmra.mxu0 %v153
    %v378 = vpop.f32.mrf.mxu0
    %v379 = vadd.f32 %v189, %v378
    %v380 = vpop.f32.mrf.mxu0
    %381 = vdwg.mxu0
    %382 = vmatpush.bf16.msra.mxu0 %v322
    %383 = vmatpush.bf16.msra.mxu0 %v318
    %384 = vmatpush.bf16.msra.mxu0 %v314
    %385 = vmatpush.bf16.msra.mxu0 %v310
    %386 = vmatpush.bf16.msra.mxu0 %v306
    %387 = vmatpush.bf16.msra.mxu0 %v302
    %388 = vmatpush.bf16.msra.mxu0 %v298
    %389 = vmatpush.bf16.msra.mxu0 %v294
    %390 = vmatmul.bf16.gmra.mxu0 %v153
    %v391 = vpop.f32.mrf.mxu0
    %v392 = vadd.f32 %v190, %v391
    %v393 = vpop.f32.mrf.mxu0
    %394 = vdwg.mxu0
    %395 = vmatpush.bf16.msra.mxu0 %v323
    %396 = vmatpush.bf16.msra.mxu0 %v319
    %397 = vmatpush.bf16.msra.mxu0 %v315
    %398 = vmatpush.bf16.msra.mxu0 %v311
    %399 = vmatpush.bf16.msra.mxu0 %v307
    %400 = vmatpush.bf16.msra.mxu0 %v303
    %401 = vmatpush.bf16.msra.mxu0 %v299
    %402 = vmatpush.bf16.msra.mxu0 %v295
    %403 = vmatmul.bf16.gmra.mxu0 %v153
    %v404 = vpop.f32.mrf.mxu0
    %v405 = vadd.f32 %v191, %v404
    %v406 = vpop.f32.mrf.mxu0
    %407 = vdwg.mxu0
    %v408 = vmul.f32 %v366, 0.05
    %v409 = vmul.f32 %v379, 0.05
    %v410 = vmul.f32 %v392, 0.05
    %v411 = vmul.f32 %v405, 0.05
    %v412 = vmax.f32 %v366, %v408
    %v413 = vmax.f32 %v379, %v409
    %v414 = vmax.f32 %v392, %v410
    %v415 = vmax.f32 %v405, %v411
    %v416 = vpack.c.bf16 %v412, %v412
    %v417 = vpack.c.bf16 %v413, %v413
    %v418 = vpack.c.bf16 %v414, %v414
    %v419 = vpack.c.bf16 %v415, %v415
    %v420 = vld [vmem:[#allocation8] sm:$0xf]
    %v421 = vld [vmem:[#allocation8 + $0x4] sm:$0xf]
    %v422 = vld [vmem:[#allocation8 + $0x8] sm:$0xf]
    %v423 = vld [vmem:[#allocation8 + $0xc] sm:$0xf]
    %v424 = vld [vmem:[#allocation8 + $0x10] sm:$0xf]
    %v425 = vld [vmem:[#allocation8 + $0x14] sm:$0xf]
    %v426 = vld [vmem:[#allocation8 + $0x18] sm:$0xf]
    %v427 = vld [vmem:[#allocation8 + $0x1c] sm:$0xf]
    %v428 = vld [vmem:[#allocation8 + $0x20] sm:$0xf]
    %v429 = vld [vmem:[#allocation8 + $0x24] sm:$0xf]
    %v430 = vld [vmem:[#allocation8 + $0x28] sm:$0xf]
    %v431 = vld [vmem:[#allocation8 + $0x2c] sm:$0xf]
    %v432 = vld [vmem:[#allocation8 + $0x30] sm:$0xf]
    %v433 = vld [vmem:[#allocation8 + $0x34] sm:$0xf]
    %v434 = vld [vmem:[#allocation8 + $0x38] sm:$0xf]
    %v435 = vld [vmem:[#allocation8 + $0x3c] sm:$0xf]
    %v436 = vld [vmem:[#allocation8 + $0x40] sm:$0xf]
    %v437 = vld [vmem:[#allocation8 + $0x44] sm:$0xf]
    %v438 = vld [vmem:[#allocation8 + $0x48] sm:$0xf]
    %v439 = vld [vmem:[#allocation8 + $0x4c] sm:$0xf]
    %v440 = vld [vmem:[#allocation8 + $0x50] sm:$0xf]
    %v441 = vld [vmem:[#allocation8 + $0x54] sm:$0xf]
    %v442 = vld [vmem:[#allocation8 + $0x58] sm:$0xf]
    %v443 = vld [vmem:[#allocation8 + $0x5c] sm:$0xf]
    %v444 = vld [vmem:[#allocation8 + $0x60] sm:$0xf]
    %v445 = vld [vmem:[#allocation8 + $0x64] sm:$0xf]
    %v446 = vld [vmem:[#allocation8 + $0x68] sm:$0xf]
    %v447 = vld [vmem:[#allocation8 + $0x6c] sm:$0xf]
    %v448 = vld [vmem:[#allocation8 + $0x70] sm:$0xf]
    %v449 = vld [vmem:[#allocation8 + $0x74] sm:$0xf]
    %v450 = vld [vmem:[#allocation8 + $0x78] sm:$0xf]
    %v451 = vld [vmem:[#allocation8 + $0x7c] sm:$0xf]
    %v452 = vld [vmem:[#allocation8 + $0x80] sm:$0xf]
    %v453 = vld [vmem:[#allocation8 + $0x84] sm:$0xf]
    %v454 = vld [vmem:[#allocation8 + $0x88] sm:$0xf]
    %v455 = vld [vmem:[#allocation8 + $0x8c] sm:$0xf]
    %v456 = vld [vmem:[#allocation8 + $0x90] sm:$0xf]
    %v457 = vld [vmem:[#allocation8 + $0x94] sm:$0xf]
    %v458 = vld [vmem:[#allocation8 + $0x98] sm:$0xf]
    %v459 = vld [vmem:[#allocation8 + $0x9c] sm:$0xf]
    %v460 = vld [vmem:[#allocation8 + $0xa0] sm:$0xf]
    %v461 = vld [vmem:[#allocation8 + $0xa4] sm:$0xf]
    %v462 = vld [vmem:[#allocation8 + $0xa8] sm:$0xf]
    %v463 = vld [vmem:[#allocation8 + $0xac] sm:$0xf]
    %v464 = vld [vmem:[#allocation8 + $0xb0] sm:$0xf]
    %v465 = vld [vmem:[#allocation8 + $0xb4] sm:$0xf]
    %v466 = vld [vmem:[#allocation8 + $0xb8] sm:$0xf]
    %v467 = vld [vmem:[#allocation8 + $0xbc] sm:$0xf]
    %v468 = vld [vmem:[#allocation8 + $0xc0] sm:$0xf]
    %v469 = vld [vmem:[#allocation8 + $0xc4] sm:$0xf]
    %v470 = vld [vmem:[#allocation8 + $0xc8] sm:$0xf]
    %v471 = vld [vmem:[#allocation8 + $0xcc] sm:$0xf]
    %v472 = vld [vmem:[#allocation8 + $0xd0] sm:$0xf]
    %v473 = vld [vmem:[#allocation8 + $0xd4] sm:$0xf]
    %v474 = vld [vmem:[#allocation8 + $0xd8] sm:$0xf]
    %v475 = vld [vmem:[#allocation8 + $0xdc] sm:$0xf]
    %v476 = vld [vmem:[#allocation8 + $0xe0] sm:$0xf]
    %v477 = vld [vmem:[#allocation8 + $0xe4] sm:$0xf]
    %v478 = vld [vmem:[#allocation8 + $0xe8] sm:$0xf]
    %v479 = vld [vmem:[#allocation8 + $0xec] sm:$0xf]
    %v480 = vld [vmem:[#allocation8 + $0xf0] sm:$0xf]
    %v481 = vld [vmem:[#allocation8 + $0xf4] sm:$0xf]
    %v482 = vld [vmem:[#allocation8 + $0xf8] sm:$0xf]
    %v483 = vld [vmem:[#allocation8 + $0xfc] sm:$0xf]
    %v484 = vld [vmem:[%s6] sm:$0x1]
    %v486 = vperm.slane %v484, 0
    %v552 = vunpack.c.l.b16 %v420
    %v553 = vunpack.c.l.b16 %v421
    %v554 = vunpack.c.l.b16 %v422
    %v555 = vunpack.c.l.b16 %v423
    %v556 = vunpack.c.l.b16 %v424
    %v557 = vunpack.c.l.b16 %v425
    %v558 = vunpack.c.l.b16 %v426
    %v559 = vunpack.c.l.b16 %v427
    %v560 = vunpack.c.l.b16 %v428
    %v561 = vunpack.c.l.b16 %v429
    %v562 = vunpack.c.l.b16 %v430
    %v563 = vunpack.c.l.b16 %v431
    %v564 = vunpack.c.l.b16 %v432
    %v565 = vunpack.c.l.b16 %v433
    %v566 = vunpack.c.l.b16 %v434
    %v567 = vunpack.c.l.b16 %v435
    %v568 = vunpack.c.l.b16 %v436
    %v569 = vunpack.c.l.b16 %v437
    %v570 = vunpack.c.l.b16 %v438
    %v571 = vunpack.c.l.b16 %v439
    %v572 = vunpack.c.l.b16 %v440
    %v573 = vunpack.c.l.b16 %v441
    %v574 = vunpack.c.l.b16 %v442
    %v575 = vunpack.c.l.b16 %v443
    %v576 = vunpack.c.l.b16 %v444
    %v577 = vunpack.c.l.b16 %v445
    %v578 = vunpack.c.l.b16 %v446
    %v579 = vunpack.c.l.b16 %v447
    %v580 = vunpack.c.l.b16 %v448
    %v581 = vunpack.c.l.b16 %v449
    %v582 = vunpack.c.l.b16 %v450
    %v583 = vunpack.c.l.b16 %v451
    %v584 = vunpack.c.l.b16 %v452
    %v585 = vunpack.c.l.b16 %v453
    %v586 = vunpack.c.l.b16 %v454
    %v587 = vunpack.c.l.b16 %v455
    %v588 = vunpack.c.l.b16 %v456
    %v589 = vunpack.c.l.b16 %v457
    %v590 = vunpack.c.l.b16 %v458
    %v591 = vunpack.c.l.b16 %v459
    %v592 = vunpack.c.l.b16 %v460
    %v593 = vunpack.c.l.b16 %v461
    %v594 = vunpack.c.l.b16 %v462
    %v595 = vunpack.c.l.b16 %v463
    %v596 = vunpack.c.l.b16 %v464
    %v597 = vunpack.c.l.b16 %v465
    %v598 = vunpack.c.l.b16 %v466
    %v599 = vunpack.c.l.b16 %v467
    %v600 = vunpack.c.l.b16 %v468
    %v601 = vunpack.c.l.b16 %v469
    %v602 = vunpack.c.l.b16 %v470
    %v603 = vunpack.c.l.b16 %v471
    %v604 = vunpack.c.l.b16 %v472
    %v605 = vunpack.c.l.b16 %v473
    %v606 = vunpack.c.l.b16 %v474
    %v607 = vunpack.c.l.b16 %v475
    %v608 = vunpack.c.l.b16 %v476
    %v609 = vunpack.c.l.b16 %v477
    %v610 = vunpack.c.l.b16 %v478
    %v611 = vunpack.c.l.b16 %v479
    %v612 = vunpack.c.l.b16 %v480
    %v613 = vunpack.c.l.b16 %v481
    %v614 = vunpack.c.l.b16 %v482
    %v615 = vunpack.c.l.b16 %v483
    %v616 = vpack.c.b16 %v553, %v552
    %v617 = vpack.c.b16 %v555, %v554
    %v618 = vpack.c.b16 %v557, %v556
    %v619 = vpack.c.b16 %v559, %v558
    %v620 = vpack.c.b16 %v561, %v560
    %v621 = vpack.c.b16 %v563, %v562
    %v622 = vpack.c.b16 %v565, %v564
    %v623 = vpack.c.b16 %v567, %v566
    %v624 = vpack.c.b16 %v569, %v568
    %v625 = vpack.c.b16 %v571, %v570
    %v626 = vpack.c.b16 %v573, %v572
    %v627 = vpack.c.b16 %v575, %v574
    %v628 = vpack.c.b16 %v577, %v576
    %v629 = vpack.c.b16 %v579, %v578
    %v630 = vpack.c.b16 %v581, %v580
    %v631 = vpack.c.b16 %v583, %v582
    %v632 = vpack.c.b16 %v585, %v584
    %v633 = vpack.c.b16 %v587, %v586
    %v634 = vpack.c.b16 %v589, %v588
    %v635 = vpack.c.b16 %v591, %v590
    %v636 = vpack.c.b16 %v593, %v592
    %v637 = vpack.c.b16 %v595, %v594
    %v638 = vpack.c.b16 %v597, %v596
    %v639 = vpack.c.b16 %v599, %v598
    %v640 = vpack.c.b16 %v601, %v600
    %v641 = vpack.c.b16 %v603, %v602
    %v642 = vpack.c.b16 %v605, %v604
    %v643 = vpack.c.b16 %v607, %v606
    %v644 = vpack.c.b16 %v609, %v608
    %v645 = vpack.c.b16 %v611, %v610
    %v646 = vpack.c.b16 %v613, %v612
    %v647 = vpack.c.b16 %v615, %v614
    %680 = vmatpush.bf16.msra.mxu0 %v623
    %681 = vmatpush.bf16.msra.mxu0 %v622
    %682 = vmatpush.bf16.msra.mxu0 %v621
    %683 = vmatpush.bf16.msra.mxu0 %v620
    %684 = vmatpush.bf16.msra.mxu0 %v619
    %685 = vmatpush.bf16.msra.mxu0 %v618
    %686 = vmatpush.bf16.msra.mxu0 %v617
    %687 = vmatpush.bf16.msra.mxu0 %v616
    %688 = vmatmul.bf16.gmra.mxu0 %v416
    %v689 = vpop.f32.mrf.mxu0
    %v690 = vadd.f32 %v486, %v689
    %v691 = vpop.f32.mrf.mxu0
    %692 = vdwg.mxu0
    %693 = vmatpush.bf16.msra.mxu0 %v631
    %694 = vmatpush.bf16.msra.mxu0 %v630
    %695 = vmatpush.bf16.msra.mxu0 %v629
    %696 = vmatpush.bf16.msra.mxu0 %v628
    %697 = vmatpush.bf16.msra.mxu0 %v627
    %698 = vmatpush.bf16.msra.mxu0 %v626
    %699 = vmatpush.bf16.msra.mxu0 %v625
    %700 = vmatpush.bf16.msra.mxu0 %v624
    %701 = vmatmul.bf16.gmra.mxu0 %v417
    %v702 = vpop.f32.mrf.mxu0
    %v703 = vadd.f32 %v690, %v702
    %v704 = vpop.f32.mrf.mxu0
    %705 = vdwg.mxu0
    %706 = vmatpush.bf16.msra.mxu0 %v639
    %707 = vmatpush.bf16.msra.mxu0 %v638
    %708 = vmatpush.bf16.msra.mxu0 %v637
    %709 = vmatpush.bf16.msra.mxu0 %v636
    %710 = vmatpush.bf16.msra.mxu0 %v635
    %711 = vmatpush.bf16.msra.mxu0 %v634
    %712 = vmatpush.bf16.msra.mxu0 %v633
    %713 = vmatpush.bf16.msra.mxu0 %v632
    %714 = vmatmul.bf16.gmra.mxu0 %v418
    %v715 = vpop.f32.mrf.mxu0
    %v716 = vadd.f32 %v703, %v715
    %v717 = vpop.f32.mrf.mxu0
    %718 = vdwg.mxu0
    %719 = vmatpush.bf16.msra.mxu0 %v647
    %720 = vmatpush.bf16.msra.mxu0 %v646
    %721 = vmatpush.bf16.msra.mxu0 %v645
    %722 = vmatpush.bf16.msra.mxu0 %v644
    %723 = vmatpush.bf16.msra.mxu0 %v643
    %724 = vmatpush.bf16.msra.mxu0 %v642
    %725 = vmatpush.bf16.msra.mxu0 %v641
    %726 = vmatpush.bf16.msra.mxu0 %v640
    %727 = vmatmul.bf16.gmra.mxu0 %v419
    %v728 = vpop.f32.mrf.mxu0
    %v729 = vadd.f32 %v716, %v728
    %v730 = vpop.f32.mrf.mxu0
    %731 = vdwg.mxu0
    %v732 = vmul.f32 %v729, 0.05
    %v733 = vmax.f32 %v729, %v732
    %v734 = vld [vmem:[%s7] sm:$0x1]
    %v736 = vperm.slane %v734, 0
    %v738 = vmul.f32 %v733, %v736
    %739 = vadd.xlane.f32.xlu0 %v738
    %v740 = vpop.xlane.xlu0 %739
    %v741 = vld [vmem:[#allocation2] sm:$0x1]
    %v743 = vperm.slane %v741, 0
    %v745 = vadd.f32 %v740, %v743
    %v746 = vmax.f32 %v745, -30.0
    %v747 = vmin.f32 %v746, 30.0
    %v748 = vsub.f32 0.0, %v747
    %v749 = vmul.f32 %v748, 1.442695
    %v750 = vpow.pop %v749
    %v751 = vadd.f32 %v750, 1.0
    %v752 = vrcp.pop %v751
    %vm753 = vcmask 7168
    %754 = vst.msk [vmem:[%s9] sm:$0xff] %vm753, %v752
    // Predicated region
    $region54: #{tpu_custom_call.1} parent=1 // pred_check
      _
    $region55: #{tpu_custom_call.1} parent=1 // pred_check_branch
      %756 = sbr.rel (0) target = $region57
    $region56: #{tpu_custom_call.1} parent=1 // pred_region
      _
    $region57: #{tpu_custom_call.1} parent=1 // pred_fallthru
      _
    // Predicated region
    $region58: #{tpu_custom_call.1} parent=1 // pred_check
      _
    $region59: #{tpu_custom_call.1} parent=1 // pred_check_branch
      %758 = sbr.rel (0) target = $region61
    $region60: #{tpu_custom_call.1} parent=1 // pred_region
      _
    $region61: #{tpu_custom_call.1} parent=1 // pred_fallthru
      _
    %759 = vsyncpa [#allocation4], 1
    %760 = vsyncpa [#allocation6], 1
    %761 = vsyncpa [#allocation9], 1

</llo_original>
